<compile_context>
chip_gen: v7x
topology: tpu7x:2x2x1
jax: 0.10.0
libtpu: 0.0.40
codegen_flags: <defaults>
</compile_context>

<pallas_src>
import functools

import jax
import jax.numpy as jnp
from jax.experimental import pallas as pl
from jax.experimental.pallas import tpu as pltpu
import numpy as np

HIDDEN = 32
NUM_HEADS = 8
HEAD_DIM = HIDDEN // NUM_HEADS
MASK_VALUE = -1e30  # large finite negative (NaN-safe; exp underflows to exactly 0)


def baby_attention_kernel(x_ref, wqkv_ref, bqkv_ref, wo_ref, bo_ref,
                          headsel_ref, bias_ref, out_ref, *, num_heads):
    x = x_ref[...]                                  # (R, C)
    R, C = x.shape
    H = num_heads
    D = C // H
    scale = float(D) ** -0.5

    # 1) fused QKV projection: one (R,C)@(C,3C) MXU push.
    qkv = jnp.dot(x, wqkv_ref[...], preferred_element_type=jnp.float32) + bqkv_ref[...]
    q = qkv[:, 0:C] * scale                         # (R, C), scale folded into q
    k = qkv[:, C:2 * C]                             # (R, C)
    v = qkv[:, 2 * C:3 * C]                         # (R, C)

    headsel = headsel_ref[...]                      # (R*H, C), 1 where lane-head == feature-head

    # 2) lane-packed scores: s[n, h*R + m] = sum_{c in head h} q[n,c] * k[m,c].
    #    Block-diagonal K built with a sublane concat (8 copies) * head selector;
    #    one (R,C)@(C,R*H)-equivalent MXU push (contraction over the last dims).
    k_bd = jnp.concatenate([k] * H, axis=0) * headsel          # (R*H, C)
    s = jnp.einsum("nc,lc->nl", q, k_bd,
                   preferred_element_type=jnp.float32) + bias_ref[...]   # (R, R*H)

    # 3) softmax over each R-lane (per-head) segment. A single global row max is a
    #    valid per-segment shift (same constant within every segment of the row)
    #    and is safely tight at these score magnitudes; masked lanes -> exp == 0.
    row_max = jnp.max(s, axis=-1, keepdims=True)    # (R, 1), XLU lane reduce
    p = jnp.exp(s - row_max)                        # (R, R*H), 2 full-vreg EUP pushes

    # 4) per-head denominators via one MXU push; result is already broadcast over
    #    the D feature lanes of each head.
    denom = jnp.dot(p, headsel, preferred_element_type=jnp.float32)      # (R, C)

    # 5) P.V with block-diagonal V; output lands directly in (head-major, dim-minor)
    #    feature order -- the same order nn.Linear's o_proj expects.
    v_bd = jnp.concatenate([v] * H, axis=0) * headsel                    # (R*H, C)
    o = jnp.dot(p, v_bd, preferred_element_type=jnp.float32) / denom     # (R, C)

    # 6) output projection: one (R,C)@(C,C) push + bias.
    out_ref[...] = jnp.dot(o, wo_ref[...],
                           preferred_element_type=jnp.float32) + bo_ref[...]


def pack_params(params, *, seq_len, batch, num_heads=NUM_HEADS):
    """One-time (init-time) packing of weights and static masks.

    Hoisted out of the per-call path per the perf review: the fused Wqkv, the
    head-selector matrix and the causal/same-batch additive bias never change.
    """
    wq, bq, wk, bk, wv, bv, wo, bo = params
    C = wq.shape[0]
    D = C // num_heads

    wqkv = jnp.concatenate([wq, wk, wv], axis=1)                 # (C, 3C)
    bqkv = jnp.concatenate([bq, bk, bv]).reshape(1, 3 * C)       # (1, 3C)
    bo2 = bo.reshape(1, C)

    # Pick how many whole batch elements go into one block: packed score width
    # rows*H must fit the 128-lane vreg, rows should stay sublane-aligned.
    # TODO(synk): for seq_len*num_heads > 128 (or large B*T) switch to flash-style
    # KV tiling instead of the single lane-packed score slab.
    assert seq_len * num_heads <= 128, "lane-packed scores need T*H <= 128"
    bpb = 1
    for cand in range(1, batch + 1):
        if batch % cand:
            continue
        rows = cand * seq_len
        if rows * num_heads > 128:
            break
        if rows % 8 == 0 or cand == batch:
            bpb = cand
    R = bpb * seq_len
    L = R * num_heads

    # Head selector (L, C): 1 where packed lane's head == feature column's head.
    lane_head = np.repeat(np.arange(num_heads), R)               # (L,)
    feat_head = np.arange(C) // D                                # (C,)
    headsel = (lane_head[:, None] == feat_head[None, :]).astype(np.float32)

    # Additive bias (R, L): 0 where (same batch element) and (key <= query), else -1e30.
    rows_idx = np.arange(R)
    key_idx = np.tile(rows_idx, num_heads)                       # packed key row per lane
    ok = (rows_idx[:, None] // seq_len == key_idx[None, :] // seq_len) & \
         (key_idx[None, :] <= rows_idx[:, None])
    bias = np.where(ok, 0.0, MASK_VALUE).astype(np.float32)

    return dict(wqkv=wqkv, bqkv=bqkv, wo=wo, bo=bo2,
                headsel=jnp.asarray(headsel), bias=jnp.asarray(bias),
                rows_per_block=R, num_heads=num_heads)


def baby_attention(x, packed):
    B, T, C = x.shape
    assert C == HIDDEN
    H = packed["num_heads"]
    R = packed["rows_per_block"]
    L = R * H
    G = (B * T) // R                      # grid steps (whole-batch-element slabs)
    x2d = x.reshape(B * T, C)

    kernel = functools.partial(baby_attention_kernel, num_heads=H)

    out2d = pl.pallas_call(
        kernel,
        out_shape=jax.ShapeDtypeStruct((B * T, C), jnp.float32),
        grid_spec=pltpu.PrefetchScalarGridSpec(
            num_scalar_prefetch=0,
            grid=(G,),
            in_specs=[
                pl.BlockSpec((R, C), lambda g: (g, 0)),          # x slab
                pl.BlockSpec((C, 3 * C), lambda g: (0, 0)),      # fused Wqkv
                pl.BlockSpec((1, 3 * C), lambda g: (0, 0)),      # fused bqkv
                pl.BlockSpec((C, C), lambda g: (0, 0)),          # Wo
                pl.BlockSpec((1, C), lambda g: (0, 0)),          # bo
                pl.BlockSpec((L, C), lambda g: (0, 0)),          # head selector
                pl.BlockSpec((R, L), lambda g: (0, 0)),          # causal/batch bias
            ],
            out_specs=pl.BlockSpec((R, C), lambda g: (g, 0)),
        ),
        # tiny input: do not ask for a cross-TensorCore split (per perf review).
        compiler_params=pltpu.CompilerParams(dimension_semantics=("arbitrary",)),
    )(x2d, packed["wqkv"], packed["bqkv"], packed["wo"], packed["bo"],
      packed["headsel"], packed["bias"])

    return out2d.reshape(B, T, C)


def reference(x, params):
    wq, bq, wk, bk, wv, bv, wo, bo = params
    B, T, C = x.shape
    H, D = NUM_HEADS, C // NUM_HEADS
    q = (x @ wq + bq).reshape(B, T, H, D).transpose(0, 2, 1, 3)
    k = (x @ wk + bk).reshape(B, T, H, D).transpose(0, 2, 1, 3)
    v = (x @ wv + bv).reshape(B, T, H, D).transpose(0, 2, 1, 3)
    s = jnp.einsum("bhtd,bhsd->bhts", q, k) * D ** -0.5
    mask = jnp.tril(jnp.ones((T, T), bool))
    s = jnp.where(mask, s, -jnp.inf)
    p = jax.nn.softmax(s, axis=-1)
    o = jnp.einsum("bhts,bhsd->bhtd", p, v).transpose(0, 2, 1, 3).reshape(B, T, C)
    return o @ wo + bo


def make_params(key):
    C = HIDDEN
    keys = jax.random.split(key, 4)

    def lin(k, fan_in, fan_out):
        kw, kb = jax.random.split(k)
        bound = 1.0 / np.sqrt(fan_in)
        w = jax.random.uniform(kw, (fan_in, fan_out), jnp.float32, -bound, bound)
        b = jax.random.uniform(kb, (fan_out,), jnp.float32, -bound, bound)
        return w, b

    wq, bq = lin(keys[0], C, C)
    wk, bk = lin(keys[1], C, C)
    wv, bv = lin(keys[2], C, C)
    wo, bo = lin(keys[3], C, C)
    return (wq, bq, wk, bk, wv, bv, wo, bo)


if __name__ == "__main__":
    key = jax.random.PRNGKey(0)
    k_x, k_p = jax.random.split(key)

    B, T, C = 2, 8, HIDDEN
    x = jax.random.normal(k_x, (B, T, C), jnp.float32)
    params = make_params(k_p)

    # Packing done once at init time (not in the per-call path).
    packed = pack_params(params, seq_len=T, batch=B)

    out = jax.block_until_ready(baby_attention(x, packed))
    ref = jax.block_until_ready(reference(x, params))

    np.testing.assert_allclose(np.asarray(out), np.asarray(ref), rtol=2e-3, atol=2e-3)
    print("KERNEL_OK")
</pallas_src>

<mosaic_0001>
module attributes {stable_mosaic.version = 11 : i64} {
  func.func @baby_attention_kernel(%arg0: i32, %arg1: memref<16x32xf32, #tpu.memory_space<vmem>>, %arg2: memref<32x96xf32, #tpu.memory_space<vmem>>, %arg3: memref<1x96xf32, #tpu.memory_space<vmem>>, %arg4: memref<32x32xf32, #tpu.memory_space<vmem>>, %arg5: memref<1x32xf32, #tpu.memory_space<vmem>>, %arg6: memref<128x32xf32, #tpu.memory_space<vmem>>, %arg7: memref<16x128xf32, #tpu.memory_space<vmem>>, %arg8: memref<16x32xf32, #tpu.memory_space<vmem>>) attributes {dimension_semantics = [#tpu.dimension_semantics<arbitrary>], iteration_bounds = array<i64: 1>, scalar_prefetch = 0 : i64, scratch_operands = 0 : i64, tpu.core_type = #tpu.core_type<tc>, window_params = [{transform_indices = @transform_0, window_bounds = array<i64: 16, 32>}, {pipeline_mode = #tpu.pipeline_mode<synchronous>, transform_indices = @transform_1, window_bounds = array<i64: 32, 96>}, {pipeline_mode = #tpu.pipeline_mode<synchronous>, transform_indices = @transform_2, window_bounds = array<i64: 1, 96>}, {pipeline_mode = #tpu.pipeline_mode<synchronous>, transform_indices = @transform_3, window_bounds = array<i64: 32, 32>}, {pipeline_mode = #tpu.pipeline_mode<synchronous>, transform_indices = @transform_4, window_bounds = array<i64: 1, 32>}, {pipeline_mode = #tpu.pipeline_mode<synchronous>, transform_indices = @transform_5, window_bounds = array<i64: 128, 32>}, {pipeline_mode = #tpu.pipeline_mode<synchronous>, transform_indices = @transform_6, window_bounds = array<i64: 16, 128>}, {transform_indices = @transform_7, window_bounds = array<i64: 16, 32>}]} {
    %c0 = arith.constant 0 : index
    %c0_0 = arith.constant 0 : index
    %0 = vector.load %arg1[%c0, %c0_0] : memref<16x32xf32, #tpu.memory_space<vmem>>, vector<16x32xf32>
    %c0_1 = arith.constant 0 : index
    %c0_2 = arith.constant 0 : index
    %1 = vector.load %arg2[%c0_1, %c0_2] : memref<32x96xf32, #tpu.memory_space<vmem>>, vector<32x96xf32>
    %cst = arith.constant dense<0.000000e+00> : vector<16x96xf32>
    %2 = tpu.matmul %0, %1, %cst {dimension_numbers = #tpu.dot_dimension_numbers<[1], [0], [0], [1], [0, 0, 1, 1], [], []>} : vector<16x32xf32>, vector<32x96xf32>, vector<16x96xf32> -> vector<16x96xf32>
    %c0_3 = arith.constant 0 : index
    %c0_4 = arith.constant 0 : index
    %3 = vector.load %arg3[%c0_3, %c0_4] : memref<1x96xf32, #tpu.memory_space<vmem>>, vector<1x96xf32>
    %4 = vector.broadcast %3 : vector<1x96xf32> to vector<16x96xf32>
    %5 = arith.addf %2, %4 : vector<16x96xf32>
    %6 = vector.extract_strided_slice %5 {offsets = [0, 0], sizes = [16, 32], strides = [1, 1]} : vector<16x96xf32> to vector<16x32xf32>
    %cst_5 = arith.constant 5.000000e-01 : f32
    %7 = vector.broadcast %cst_5 : f32 to vector<16x32xf32>
    %8 = arith.mulf %6, %7 : vector<16x32xf32>
    %9 = vector.extract_strided_slice %5 {offsets = [0, 32], sizes = [16, 32], strides = [1, 1]} : vector<16x96xf32> to vector<16x32xf32>
    %10 = vector.extract_strided_slice %5 {offsets = [0, 64], sizes = [16, 32], strides = [1, 1]} : vector<16x96xf32> to vector<16x32xf32>
    %c0_6 = arith.constant 0 : index
    %c0_7 = arith.constant 0 : index
    %11 = vector.load %arg6[%c0_6, %c0_7] : memref<128x32xf32, #tpu.memory_space<vmem>>, vector<128x32xf32>
    %12 = tpu.concatenate %9, %9, %9, %9, %9, %9, %9, %9 in 0 : vector<16x32xf32>, vector<16x32xf32>, vector<16x32xf32>, vector<16x32xf32>, vector<16x32xf32>, vector<16x32xf32>, vector<16x32xf32>, vector<16x32xf32> -> vector<128x32xf32>
    %13 = arith.mulf %12, %11 : vector<128x32xf32>
    "tpu.trace_start"() <{level = 10 : i32, message = "nc,lc->nl"}> : () -> ()
    %cst_8 = arith.constant dense<0.000000e+00> : vector<16x128xf32>
    %14 = tpu.matmul %8, %13, %cst_8 {dimension_numbers = #tpu.dot_dimension_numbers<[1], [1], [0], [0], [0, 0, 1, 0], [], []>} : vector<16x32xf32>, vector<128x32xf32>, vector<16x128xf32> -> vector<16x128xf32>
    "tpu.trace_stop"() : () -> ()
    %c0_9 = arith.constant 0 : index
    %c0_10 = arith.constant 0 : index
    %15 = vector.load %arg7[%c0_9, %c0_10] : memref<16x128xf32, #tpu.memory_space<vmem>>, vector<16x128xf32>
    %16 = arith.addf %14, %15 : vector<16x128xf32>
    %cst_11 = arith.constant dense<0xFF800000> : vector<16xf32>
    %17 = vector.multi_reduction <maximumf>, %16, %cst_11 [1] : vector<16x128xf32> to vector<16xf32>
    %18 = vector.shape_cast %17 : vector<16xf32> to vector<16x1xf32>
    %19 = vector.broadcast %18 : vector<16x1xf32> to vector<16x128xf32>
    %20 = arith.subf %16, %19 : vector<16x128xf32>
    %21 = math.exp %20 : vector<16x128xf32>
    %cst_12 = arith.constant dense<0.000000e+00> : vector<16x32xf32>
    %22 = tpu.matmul %21, %11, %cst_12 {dimension_numbers = #tpu.dot_dimension_numbers<[1], [0], [0], [1], [0, 0, 1, 1], [], []>} : vector<16x128xf32>, vector<128x32xf32>, vector<16x32xf32> -> vector<16x32xf32>
    %23 = tpu.concatenate %10, %10, %10, %10, %10, %10, %10, %10 in 0 : vector<16x32xf32>, vector<16x32xf32>, vector<16x32xf32>, vector<16x32xf32>, vector<16x32xf32>, vector<16x32xf32>, vector<16x32xf32>, vector<16x32xf32> -> vector<128x32xf32>
    %24 = arith.mulf %23, %11 : vector<128x32xf32>
    %cst_13 = arith.constant dense<0.000000e+00> : vector<16x32xf32>
    %25 = tpu.matmul %21, %24, %cst_13 {dimension_numbers = #tpu.dot_dimension_numbers<[1], [0], [0], [1], [0, 0, 1, 1], [], []>} : vector<16x128xf32>, vector<128x32xf32>, vector<16x32xf32> -> vector<16x32xf32>
    %26 = arith.divf %25, %22 : vector<16x32xf32>
    %c0_14 = arith.constant 0 : index
    %c0_15 = arith.constant 0 : index
    %27 = vector.load %arg4[%c0_14, %c0_15] : memref<32x32xf32, #tpu.memory_space<vmem>>, vector<32x32xf32>
    %cst_16 = arith.constant dense<0.000000e+00> : vector<16x32xf32>
    %28 = tpu.matmul %26, %27, %cst_16 {dimension_numbers = #tpu.dot_dimension_numbers<[1], [0], [0], [1], [0, 0, 1, 1], [], []>} : vector<16x32xf32>, vector<32x32xf32>, vector<16x32xf32> -> vector<16x32xf32>
    %c0_17 = arith.constant 0 : index
    %c0_18 = arith.constant 0 : index
    %29 = vector.load %arg5[%c0_17, %c0_18] : memref<1x32xf32, #tpu.memory_space<vmem>>, vector<1x32xf32>
    %30 = vector.broadcast %29 : vector<1x32xf32> to vector<16x32xf32>
    %31 = arith.addf %28, %30 : vector<16x32xf32>
    %c0_19 = arith.constant 0 : index
    %c0_20 = arith.constant 0 : index
    %32 = vector.load %arg8[%c0_19, %c0_20] : memref<16x32xf32, #tpu.memory_space<vmem>>, vector<16x32xf32>
    tpu.vector_store %arg8[%c0_19, %c0_20], %31 {strides = array<i32>} : memref<16x32xf32, #tpu.memory_space<vmem>>, vector<16x32xf32>,
    return
  }
  func.func @transform_0(%arg0: i32) -> (i32, i32) {
    %c0_i32 = arith.constant 0 : i32
    %c0_i32_0 = arith.constant 0 : i32
    return %arg0, %c0_i32 : i32, i32
  }
  func.func @transform_1(%arg0: i32) -> (i32, i32) {
    %c0_i32 = arith.constant 0 : i32
    %c0_i32_0 = arith.constant 0 : i32
    %c0_i32_1 = arith.constant 0 : i32
    return %c0_i32, %c0_i32_0 : i32, i32
  }
  func.func @transform_2(%arg0: i32) -> (i32, i32) {
    %c0_i32 = arith.constant 0 : i32
    %c0_i32_0 = arith.constant 0 : i32
    %c0_i32_1 = arith.constant 0 : i32
    return %c0_i32, %c0_i32_0 : i32, i32
  }
  func.func @transform_3(%arg0: i32) -> (i32, i32) {
    %c0_i32 = arith.constant 0 : i32
    %c0_i32_0 = arith.constant 0 : i32
    %c0_i32_1 = arith.constant 0 : i32
    return %c0_i32, %c0_i32_0 : i32, i32
  }
  func.func @transform_4(%arg0: i32) -> (i32, i32) {
    %c0_i32 = arith.constant 0 : i32
    %c0_i32_0 = arith.constant 0 : i32
    %c0_i32_1 = arith.constant 0 : i32
    return %c0_i32, %c0_i32_0 : i32, i32
  }
  func.func @transform_5(%arg0: i32) -> (i32, i32) {
    %c0_i32 = arith.constant 0 : i32
    %c0_i32_0 = arith.constant 0 : i32
    %c0_i32_1 = arith.constant 0 : i32
    return %c0_i32, %c0_i32_0 : i32, i32
  }
  func.func @transform_6(%arg0: i32) -> (i32, i32) {
    %c0_i32 = arith.constant 0 : i32
    %c0_i32_0 = arith.constant 0 : i32
    %c0_i32_1 = arith.constant 0 : i32
    return %c0_i32, %c0_i32_0 : i32, i32
  }
  func.func @transform_7(%arg0: i32) -> (i32, i32) {
    %c0_i32 = arith.constant 0 : i32
    %c0_i32_0 = arith.constant 0 : i32
    return %arg0, %c0_i32 : i32, i32
  }
}

</mosaic_0001>

<llo_original>
// kernel: tpu_custom_call.1
$region0: #{tpu_custom_call.1}
  #allocation0 [shape = 'u32[]', space=smem, size = 0x4, offset = 0x4, fixed_abs, tag = 'smem constant byte address 0x4 - core index']
  #allocation1 [shape = 'u32[144,128]{1,0:T(1,128)}', space=vmem, size = 0x12000, scoped, tag = 'internal scratch']
  %s0 = inlined_call_operand.vmem [shape: f32[16,32], index: 0, kind: input, shape index: {}]
  %s1 = inlined_call_operand.vmem [shape: f32[32,96], index: 1, kind: input, shape index: {}]
  %s2 = inlined_call_operand.vmem [shape: f32[1,96], index: 2, kind: input, shape index: {}]
  %s3 = inlined_call_operand.vmem [shape: f32[32,32], index: 3, kind: input, shape index: {}]
  %s4 = inlined_call_operand.vmem [shape: f32[1,32], index: 4, kind: input, shape index: {}]
  %s5 = inlined_call_operand.vmem [shape: f32[128,32], index: 5, kind: input, shape index: {}]
  %s6 = inlined_call_operand.vmem [shape: f32[16,128], index: 6, kind: input, shape index: {}]
  %s7 = inlined_call_operand.hbm [shape: f32[16,32], index: 7, kind: output, shape index: {}]
  %s8 = sld [smem:[#allocation0]]
  $region38: #{tpu_custom_call.1} parent=0
    _
  %s10 = ssub.s32 1, %s8
  %s11 = scalar_select 0, %s10, %s8
  $region1: #{tpu_custom_call.1} parent=0
    #allocation2 [shape = 'u8[8192]{0}', space=vmem, size = 0x2000, scoped, tag = 'output window, operand 0, single buffered']
    #allocation3 [shape = 's32[1]{0}', space=sflag, size = 0x4, scoped, tag = 'scoped memory for tpu_custom_call.1']
    %12 = vsyncpa [#allocation3], 0
    // Predicated region
    $region2: #{tpu_custom_call.1} parent=1 // pred_check
      _
    $region3: #{tpu_custom_call.1} parent=1 // pred_check_branch
      %14 = sbr.rel (0) target = $region5
    $region4: #{tpu_custom_call.1} parent=1 // pred_region
      _
    $region5: #{tpu_custom_call.1} parent=1 // pred_fallthru
      _
    // Predicated region
    $region6: #{tpu_custom_call.1} parent=1 // pred_check
      _
    $region7: #{tpu_custom_call.1} parent=1 // pred_check_branch
      %16 = sbr.rel (0) target = $region9
    $region8: #{tpu_custom_call.1} parent=1 // pred_region
      _
    $region9: #{tpu_custom_call.1} parent=1 // pred_fallthru
      _
    // Predicated region
    $region10: #{tpu_custom_call.1} parent=1 // pred_check
      _
    $region11: #{tpu_custom_call.1} parent=1 // pred_check_branch
      %18 = sbr.rel (0) target = $region13
    $region12: #{tpu_custom_call.1} parent=1 // pred_region
      _
    $region13: #{tpu_custom_call.1} parent=1 // pred_fallthru
      _
    // Predicated region
    $region14: #{tpu_custom_call.1} parent=1 // pred_check
      _
    $region15: #{tpu_custom_call.1} parent=1 // pred_check_branch
      %20 = sbr.rel (0) target = $region17
    $region16: #{tpu_custom_call.1} parent=1 // pred_region
      _
    $region17: #{tpu_custom_call.1} parent=1 // pred_fallthru
      _
    // Predicated region
    $region18: #{tpu_custom_call.1} parent=1 // pred_check
      _
    $region19: #{tpu_custom_call.1} parent=1 // pred_check_branch
      %22 = sbr.rel (0) target = $region21
    $region20: #{tpu_custom_call.1} parent=1 // pred_region
      _
    $region21: #{tpu_custom_call.1} parent=1 // pred_fallthru
      _
    // Predicated region
    $region22: #{tpu_custom_call.1} parent=1 // pred_check
      _
    $region23: #{tpu_custom_call.1} parent=1 // pred_check_branch
      %24 = sbr.rel (0) target = $region25
    $region24: #{tpu_custom_call.1} parent=1 // pred_region
      _
    $region25: #{tpu_custom_call.1} parent=1 // pred_fallthru
      _
    // Predicated region
    $region26: #{tpu_custom_call.1} parent=1 // pred_check
      _
    $region27: #{tpu_custom_call.1} parent=1 // pred_check_branch
      %26 = sbr.rel (0) target = $region29
    $region28: #{tpu_custom_call.1} parent=1 // pred_region
      _
    $region29: #{tpu_custom_call.1} parent=1 // pred_fallthru
      _
    %v27 = vld [vmem:[%s0] sm:$0xff]
    %v28 = vld [vmem:[%s0 + $0x8] sm:$0xff]
    %v29 = vld [vmem:[%s1] sm:$0xff]
    %v30 = vld [vmem:[%s1 + $0x8] sm:$0xff]
    %v31 = vld [vmem:[%s1 + $0x10] sm:$0xff]
    %v32 = vld [vmem:[%s1 + $0x18] sm:$0xff]
    %v33 = vld [vmem:[%s2] sm:$0x1]
    %v35 = vlaneseq
    %v36 = vshrl.u32 %v35, 7
    %v37 = vsub.s32 0, %v36
    %v38 = vrot.slane %v33, %v37
    %vm40 = vcmask 261120
    %v42 = vsel %vm40, %v27, 0
    %v45 = vsel %vm40, %v28, 0
    %47 = vmatprep.subr.mxu0 0.0
    %48 = vmatpush1.msra.mxu0 %v29
    %49 = vmatprep.subr.mxu0 0.0
    %50 = vmatpush1.msra.mxu0 %v30
    %51 = vmatprep.subr.mxu0 0.0
    %52 = vmatpush1.msra.mxu0 %v31
    %53 = vmatprep.subr.mxu0 0.0
    %54 = vmatpush1.msra.mxu0 %v32
    %55 = vmatprep.subr.mxu0 0.0
    %56 = vmatpush1.msra.mxu0 0.0
    %57 = vmatprep.subr.mxu0 0.0
    %58 = vmatpush1.msra.mxu0 0.0
    %59 = vmatprep.subr.mxu0 0.0
    %60 = vmatpush1.msra.mxu0 0.0
    %61 = vmatprep.subr.mxu0 0.0
    %62 = vmatpush1.msra.mxu0 0.0
    %63 = vmatprep.subr.mxu0 0.0
    %64 = vmatpush1.msra.mxu0 0.0
    %65 = vmatprep.subr.mxu0 0.0
    %66 = vmatpush1.msra.mxu0 0.0
    %67 = vmatprep.subr.mxu0 0.0
    %68 = vmatpush1.msra.mxu0 0.0
    %69 = vmatprep.subr.mxu0 0.0
    %70 = vmatpush1.msra.mxu0 0.0
    %71 = vmatprep.subr.mxu0 0.0
    %72 = vmatpush1.msra.mxu0 0.0
    %73 = vmatprep.subr.mxu0 0.0
    %74 = vmatpush1.msra.mxu0 0.0
    %75 = vmatprep.subr.mxu0 0.0
    %76 = vmatpush1.msra.mxu0 0.0
    %77 = vmatprep.subr.mxu0 0.0
    %78 = vmatpush1.msra.mxu0 0.0
    %79 = vmatprep.subr.mxu0 0.0
    %80 = vmatpush1.msra.mxu0 0.0
    %81 = vmatprep.subr.mxu0 0.0
    %82 = vmatpush1.msra.mxu0 0.0
    %83 = vmatprep.subr.mxu0 0.0
    %84 = vmatpush1.msra.mxu0 0.0
    %85 = vmatprep.subr.mxu0 0.0
    %86 = vmatpush1.msra.mxu0 0.0
    %87 = vmatprep.subr.mxu0 0.0
    %88 = vmatpush1.msra.mxu0 0.0
    %89 = vmatprep.subr.mxu0 0.0
    %90 = vmatpush1.msra.mxu0 0.0
    %91 = vmatprep.subr.mxu0 0.0
    %92 = vmatpush1.msra.mxu0 0.0
    %93 = vmatprep.subr.mxu0 0.0
    %94 = vmatpush1.msra.mxu0 0.0
    %95 = vmatprep.subr.mxu0 0.0
    %96 = vmatpush1.msra.mxu0 0.0
    %97 = vmatprep.subr.mxu0 0.0
    %98 = vmatpush1.msra.mxu0 0.0
    %99 = vmatprep.subr.mxu0 0.0
    %100 = vmatpush1.msra.mxu0 0.0
    %101 = vmatprep.subr.mxu0 0.0
    %102 = vmatpush1.msra.mxu0 0.0
    %103 = vmatprep.subr.mxu0 0.0
    %104 = vmatpush1.msra.mxu0 0.0
    %105 = vmatprep.subr.mxu0 0.0
    %106 = vmatpush1.msra.mxu0 0.0
    %107 = vmatprep.subr.mxu0 0.0
    %108 = vmatpush1.msra.mxu0 0.0
    %109 = vmatprep.subr.mxu0 0.0
    %110 = vmatpush1.msra.mxu0 0.0
    %111 = vmatprep.mubr.f32.mxu0 0.0
    %112 = vmatmul.mubr.f32.gmra.mrb[0].mxu0 %v42
    %v113 = vpop.f32.mrb[0].mxu0
    %v114 = vadd.f32 %v38, %v113
    %v115 = vpop.f32.mrb[0].mxu0
    %116 = vmatprep.mubr.f32.mxu0 0.0
    %117 = vmatmul.mubr.f32.gmra.mrb[0].mxu0 %v45
    %v118 = vpop.f32.mrb[0].mxu0
    %v119 = vadd.f32 %v38, %v118
    %v120 = vpop.f32.mrb[0].mxu0
    %121 = vdwg.mxu0
    %v122 = vmul.f32 %v114, 0.5
    %v123 = vmul.f32 %v119, 0.5
    %v124 = vld [vmem:[%s5] sm:$0xff]
    %v125 = vld [vmem:[%s5 + $0x8] sm:$0xff]
    %v126 = vld [vmem:[%s5 + $0x10] sm:$0xff]
    %v127 = vld [vmem:[%s5 + $0x18] sm:$0xff]
    %v128 = vld [vmem:[%s5 + $0x20] sm:$0xff]
    %v129 = vld [vmem:[%s5 + $0x28] sm:$0xff]
    %v130 = vld [vmem:[%s5 + $0x30] sm:$0xff]
    %v131 = vld [vmem:[%s5 + $0x38] sm:$0xff]
    %v132 = vld [vmem:[%s5 + $0x40] sm:$0xff]
    %v133 = vld [vmem:[%s5 + $0x48] sm:$0xff]
    %v134 = vld [vmem:[%s5 + $0x50] sm:$0xff]
    %v135 = vld [vmem:[%s5 + $0x58] sm:$0xff]
    %v136 = vld [vmem:[%s5 + $0x60] sm:$0xff]
    %v137 = vld [vmem:[%s5 + $0x68] sm:$0xff]
    %v138 = vld [vmem:[%s5 + $0x70] sm:$0xff]
    %v139 = vld [vmem:[%s5 + $0x78] sm:$0xff]
    %156 = vrot.lane.b32.xlu0 %v124, 32
    %v157 = vpop.permute.xlu0 %156
    %158 = vrot.lane.b32.xlu0 %v125, 32
    %v159 = vpop.permute.xlu0 %158
    %160 = vrot.lane.b32.xlu0 %v126, 32
    %v161 = vpop.permute.xlu0 %160
    %162 = vrot.lane.b32.xlu0 %v127, 32
    %v163 = vpop.permute.xlu0 %162
    %164 = vrot.lane.b32.xlu0 %v128, 32
    %v165 = vpop.permute.xlu0 %164
    %166 = vrot.lane.b32.xlu0 %v129, 32
    %v167 = vpop.permute.xlu0 %166
    %168 = vrot.lane.b32.xlu0 %v130, 32
    %v169 = vpop.permute.xlu0 %168
    %170 = vrot.lane.b32.xlu0 %v131, 32
    %v171 = vpop.permute.xlu0 %170
    %172 = vrot.lane.b32.xlu0 %v132, 32
    %v173 = vpop.permute.xlu0 %172
    %174 = vrot.lane.b32.xlu0 %v133, 32
    %v175 = vpop.permute.xlu0 %174
    %176 = vrot.lane.b32.xlu0 %v134, 32
    %v177 = vpop.permute.xlu0 %176
    %178 = vrot.lane.b32.xlu0 %v135, 32
    %v179 = vpop.permute.xlu0 %178
    %180 = vrot.lane.b32.xlu0 %v136, 32
    %v181 = vpop.permute.xlu0 %180
    %182 = vrot.lane.b32.xlu0 %v137, 32
    %v183 = vpop.permute.xlu0 %182
    %184 = vrot.lane.b32.xlu0 %v138, 32
    %v185 = vpop.permute.xlu0 %184
    %186 = vrot.lane.b32.xlu0 %v139, 32
    %v187 = vpop.permute.xlu0 %186
    %v204 = vmul.f32 %v114, %v157
    %v205 = vmul.f32 %v119, %v159
    %v206 = vmul.f32 %v114, %v161
    %v207 = vmul.f32 %v119, %v163
    %v208 = vmul.f32 %v114, %v165
    %v209 = vmul.f32 %v119, %v167
    %v210 = vmul.f32 %v114, %v169
    %v211 = vmul.f32 %v119, %v171
    %v212 = vmul.f32 %v114, %v173
    %v213 = vmul.f32 %v119, %v175
    %v214 = vmul.f32 %v114, %v177
    %v215 = vmul.f32 %v119, %v179
    %v216 = vmul.f32 %v114, %v181
    %v217 = vmul.f32 %v119, %v183
    %v218 = vmul.f32 %v114, %v185
    %v219 = vmul.f32 %v119, %v187
    %v220 = vld [vmem:[%s6] sm:$0xff]
    %v221 = vld [vmem:[%s6 + $0x8] sm:$0xff]
    %238 = vrot.lane.b32.xlu0 %v204, 96
    %v239 = vpop.permute.xlu0 %238
    %240 = vrot.lane.b32.xlu0 %v205, 96
    %v241 = vpop.permute.xlu0 %240
    %242 = vrot.lane.b32.xlu0 %v206, 96
    %v243 = vpop.permute.xlu0 %242
    %244 = vrot.lane.b32.xlu0 %v207, 96
    %v245 = vpop.permute.xlu0 %244
    %246 = vrot.lane.b32.xlu0 %v208, 96
    %v247 = vpop.permute.xlu0 %246
    %248 = vrot.lane.b32.xlu0 %v209, 96
    %v249 = vpop.permute.xlu0 %248
    %250 = vrot.lane.b32.xlu0 %v210, 96
    %v251 = vpop.permute.xlu0 %250
    %252 = vrot.lane.b32.xlu0 %v211, 96
    %v253 = vpop.permute.xlu0 %252
    %254 = vrot.lane.b32.xlu0 %v212, 96
    %v255 = vpop.permute.xlu0 %254
    %256 = vrot.lane.b32.xlu0 %v213, 96
    %v257 = vpop.permute.xlu0 %256
    %258 = vrot.lane.b32.xlu0 %v214, 96
    %v259 = vpop.permute.xlu0 %258
    %260 = vrot.lane.b32.xlu0 %v215, 96
    %v261 = vpop.permute.xlu0 %260
    %262 = vrot.lane.b32.xlu0 %v216, 96
    %v263 = vpop.permute.xlu0 %262
    %264 = vrot.lane.b32.xlu0 %v217, 96
    %v265 = vpop.permute.xlu0 %264
    %266 = vrot.lane.b32.xlu0 %v218, 96
    %v267 = vpop.permute.xlu0 %266
    %268 = vrot.lane.b32.xlu0 %v219, 96
    %v269 = vpop.permute.xlu0 %268
    %v271 = vsel %vm40, %v122, 0
    %v274 = vsel %vm40, %v123, 0
    %v276 = vsel %vm40, %v239, 0
    %v278 = vsel %vm40, %v241, 0
    %v280 = vsel %vm40, %v243, 0
    %v282 = vsel %vm40, %v245, 0
    %v284 = vsel %vm40, %v247, 0
    %v286 = vsel %vm40, %v249, 0
    %v288 = vsel %vm40, %v251, 0
    %v290 = vsel %vm40, %v253, 0
    %v292 = vsel %vm40, %v255, 0
    %v294 = vsel %vm40, %v257, 0
    %v296 = vsel %vm40, %v259, 0
    %v298 = vsel %vm40, %v261, 0
    %v300 = vsel %vm40, %v263, 0
    %v302 = vsel %vm40, %v265, 0
    %v304 = vsel %vm40, %v267, 0
    %v306 = vsel %vm40, %v269, 0
    %308 = vmatprep.subr.mxu0 0.0
    %309 = vmatpush1.xpose.msra.mxu0 %v276
    %310 = vmatprep.subr.mxu0 0.0
    %311 = vmatpush1.xpose.msra.mxu0 %v278
    %312 = vmatprep.subr.mxu0 0.0
    %313 = vmatpush1.xpose.msra.mxu0 %v280
    %314 = vmatprep.subr.mxu0 0.0
    %315 = vmatpush1.xpose.msra.mxu0 %v282
    %316 = vmatprep.subr.mxu0 0.0
    %317 = vmatpush1.xpose.msra.mxu0 %v284
    %318 = vmatprep.subr.mxu0 0.0
    %319 = vmatpush1.xpose.msra.mxu0 %v286
    %320 = vmatprep.subr.mxu0 0.0
    %321 = vmatpush1.xpose.msra.mxu0 %v288
    %322 = vmatprep.subr.mxu0 0.0
    %323 = vmatpush1.xpose.msra.mxu0 %v290
    %324 = vmatprep.subr.mxu0 0.0
    %325 = vmatpush1.xpose.msra.mxu0 %v292
    %326 = vmatprep.subr.mxu0 0.0
    %327 = vmatpush1.xpose.msra.mxu0 %v294
    %328 = vmatprep.subr.mxu0 0.0
    %329 = vmatpush1.xpose.msra.mxu0 %v296
    %330 = vmatprep.subr.mxu0 0.0
    %331 = vmatpush1.xpose.msra.mxu0 %v298
    %332 = vmatprep.subr.mxu0 0.0
    %333 = vmatpush1.xpose.msra.mxu0 %v300
    %334 = vmatprep.subr.mxu0 0.0
    %335 = vmatpush1.xpose.msra.mxu0 %v302
    %336 = vmatprep.subr.mxu0 0.0
    %337 = vmatpush1.xpose.msra.mxu0 %v304
    %338 = vmatprep.subr.mxu0 0.0
    %339 = vmatpush1.xpose.msra.mxu0 %v306
    %340 = vmatprep.subr.mxu0 0.0
    %341 = vmatpush1.xpose.msra.mxu0 0.0
    %342 = vmatprep.subr.mxu0 0.0
    %343 = vmatpush1.xpose.msra.mxu0 0.0
    %344 = vmatprep.subr.mxu0 0.0
    %345 = vmatpush1.xpose.msra.mxu0 0.0
    %346 = vmatprep.subr.mxu0 0.0
    %347 = vmatpush1.xpose.msra.mxu0 0.0
    %348 = vmatprep.subr.mxu0 0.0
    %349 = vmatpush1.xpose.msra.mxu0 0.0
    %350 = vmatprep.subr.mxu0 0.0
    %351 = vmatpush1.xpose.msra.mxu0 0.0
    %352 = vmatprep.subr.mxu0 0.0
    %353 = vmatpush1.xpose.msra.mxu0 0.0
    %354 = vmatprep.subr.mxu0 0.0
    %355 = vmatpush1.xpose.msra.mxu0 0.0
    %356 = vmatprep.subr.mxu0 0.0
    %357 = vmatpush1.xpose.msra.mxu0 0.0
    %358 = vmatprep.subr.mxu0 0.0
    %359 = vmatpush1.xpose.msra.mxu0 0.0
    %360 = vmatprep.subr.mxu0 0.0
    %361 = vmatpush1.xpose.msra.mxu0 0.0
    %362 = vmatprep.subr.mxu0 0.0
    %363 = vmatpush1.xpose.msra.mxu0 0.0
    %364 = vmatprep.subr.mxu0 0.0
    %365 = vmatpush1.xpose.msra.mxu0 0.0
    %366 = vmatprep.subr.mxu0 0.0
    %367 = vmatpush1.xpose.msra.mxu0 0.0
    %368 = vmatprep.subr.mxu0 0.0
    %369 = vmatpush1.xpose.msra.mxu0 0.0
    %370 = vmatprep.subr.mxu0 0.0
    %371 = vmatpush1.xpose.msra.mxu0 0.0
    %372 = vmatprep.mubr.f32.mxu0 0.0
    %373 = vmatmul.mubr.f32.gmra.mrb[0].mxu0 %v271
    %v374 = vpop.f32.mrb[0].mxu0
    %v375 = vadd.f32 %v220, %v374
    %v376 = vpop.f32.mrb[0].mxu0
    %377 = vmatprep.mubr.f32.mxu0 0.0
    %378 = vmatmul.mubr.f32.gmra.mrb[0].mxu0 %v274
    %v379 = vpop.f32.mrb[0].mxu0
    %v380 = vadd.f32 %v221, %v379
    %v381 = vpop.f32.mrb[0].mxu0
    %382 = vdwg.mxu0
    %383 = vmax.xlane.f32.xlu0 %v375
    %v384 = vpop.xlane.xlu0 %383
    %385 = vmax.xlane.f32.xlu0 %v380
    %v386 = vpop.xlane.xlu0 %385
    %v387 = vsub.f32 %v375, %v384
    %v388 = vsub.f32 %v380, %v386
    %v389 = vmul.f32 %v387, 1.442695
    %v390 = vpow.pop %v389
    %v391 = vmul.f32 %v388, 1.442695
    %v392 = vpow.pop %v391
    %393 = vmatprep.subr.mxu0 0.0
    %394 = vmatpush1.msra.mxu0 %v124
    %395 = vmatprep.subr.mxu0 0.0
    %396 = vmatpush1.msra.mxu0 %v125
    %397 = vmatprep.subr.mxu0 0.0
    %398 = vmatpush1.msra.mxu0 %v126
    %399 = vmatprep.subr.mxu0 0.0
    %400 = vmatpush1.msra.mxu0 %v127
    %401 = vmatprep.subr.mxu0 0.0
    %402 = vmatpush1.msra.mxu0 %v128
    %403 = vmatprep.subr.mxu0 0.0
    %404 = vmatpush1.msra.mxu0 %v129
    %405 = vmatprep.subr.mxu0 0.0
    %406 = vmatpush1.msra.mxu0 %v130
    %407 = vmatprep.subr.mxu0 0.0
    %408 = vmatpush1.msra.mxu0 %v131
    %409 = vmatprep.subr.mxu0 0.0
    %410 = vmatpush1.msra.mxu0 %v132
    %411 = vmatprep.subr.mxu0 0.0
    %412 = vmatpush1.msra.mxu0 %v133
    %413 = vmatprep.subr.mxu0 0.0
    %414 = vmatpush1.msra.mxu0 %v134
    %415 = vmatprep.subr.mxu0 0.0
    %416 = vmatpush1.msra.mxu0 %v135
    %417 = vmatprep.subr.mxu0 0.0
    %418 = vmatpush1.msra.mxu0 %v136
    %419 = vmatprep.subr.mxu0 0.0
    %420 = vmatpush1.msra.mxu0 %v137
    %421 = vmatprep.subr.mxu0 0.0
    %422 = vmatpush1.msra.mxu0 %v138
    %423 = vmatprep.subr.mxu0 0.0
    %424 = vmatpush1.msra.mxu0 %v139
    %425 = vmatprep.subr.mxu0 0.0
    %426 = vmatpush1.msra.mxu0 0.0
    %427 = vmatprep.subr.mxu0 0.0
    %428 = vmatpush1.msra.mxu0 0.0
    %429 = vmatprep.subr.mxu0 0.0
    %430 = vmatpush1.msra.mxu0 0.0
    %431 = vmatprep.subr.mxu0 0.0
    %432 = vmatpush1.msra.mxu0 0.0
    %433 = vmatprep.subr.mxu0 0.0
    %434 = vmatpush1.msra.mxu0 0.0
    %435 = vmatprep.subr.mxu0 0.0
    %436 = vmatpush1.msra.mxu0 0.0
    %437 = vmatprep.subr.mxu0 0.0
    %438 = vmatpush1.msra.mxu0 0.0
    %439 = vmatprep.subr.mxu0 0.0
    %440 = vmatpush1.msra.mxu0 0.0
    %441 = vmatprep.subr.mxu0 0.0
    %442 = vmatpush1.msra.mxu0 0.0
    %443 = vmatprep.subr.mxu0 0.0
    %444 = vmatpush1.msra.mxu0 0.0
    %445 = vmatprep.subr.mxu0 0.0
    %446 = vmatpush1.msra.mxu0 0.0
    %447 = vmatprep.subr.mxu0 0.0
    %448 = vmatpush1.msra.mxu0 0.0
    %449 = vmatprep.subr.mxu0 0.0
    %450 = vmatpush1.msra.mxu0 0.0
    %451 = vmatprep.subr.mxu0 0.0
    %452 = vmatpush1.msra.mxu0 0.0
    %453 = vmatprep.subr.mxu0 0.0
    %454 = vmatpush1.msra.mxu0 0.0
    %455 = vmatprep.subr.mxu0 0.0
    %456 = vmatpush1.msra.mxu0 0.0
    %457 = vmatprep.mubr.f32.mxu0 0.0
    %458 = vmatmul.mubr.f32.gmra.mrb[0].mxu0 %v390
    %v459 = vpop.f32.mrb[0].mxu0
    %v460 = vadd.f32 0.0, %v459
    %v461 = vpop.f32.mrb[0].mxu0
    %462 = vmatprep.mubr.f32.mxu0 0.0
    %463 = vmatmul.mubr.f32.gmra.mrb[0].mxu0 %v392
    %v464 = vpop.f32.mrb[0].mxu0
    %v465 = vadd.f32 0.0, %v464
    %v466 = vpop.f32.mrb[0].mxu0
    %467 = vdwg.mxu0
    %468 = vrot.lane.b32.xlu0 %v124, 64
    %v469 = vpop.permute.xlu0 %468
    %470 = vrot.lane.b32.xlu0 %v125, 64
    %v471 = vpop.permute.xlu0 %470
    %472 = vrot.lane.b32.xlu0 %v126, 64
    %v473 = vpop.permute.xlu0 %472
    %474 = vrot.lane.b32.xlu0 %v127, 64
    %v475 = vpop.permute.xlu0 %474
    %476 = vrot.lane.b32.xlu0 %v128, 64
    %v477 = vpop.permute.xlu0 %476
    %478 = vrot.lane.b32.xlu0 %v129, 64
    %v479 = vpop.permute.xlu0 %478
    %480 = vrot.lane.b32.xlu0 %v130, 64
    %v481 = vpop.permute.xlu0 %480
    %482 = vrot.lane.b32.xlu0 %v131, 64
    %v483 = vpop.permute.xlu0 %482
    %484 = vrot.lane.b32.xlu0 %v132, 64
    %v485 = vpop.permute.xlu0 %484
    %486 = vrot.lane.b32.xlu0 %v133, 64
    %v487 = vpop.permute.xlu0 %486
    %488 = vrot.lane.b32.xlu0 %v134, 64
    %v489 = vpop.permute.xlu0 %488
    %490 = vrot.lane.b32.xlu0 %v135, 64
    %v491 = vpop.permute.xlu0 %490
    %492 = vrot.lane.b32.xlu0 %v136, 64
    %v493 = vpop.permute.xlu0 %492
    %494 = vrot.lane.b32.xlu0 %v137, 64
    %v495 = vpop.permute.xlu0 %494
    %496 = vrot.lane.b32.xlu0 %v138, 64
    %v497 = vpop.permute.xlu0 %496
    %498 = vrot.lane.b32.xlu0 %v139, 64
    %v499 = vpop.permute.xlu0 %498
    %v516 = vmul.f32 %v114, %v469
    %v517 = vmul.f32 %v119, %v471
    %v518 = vmul.f32 %v114, %v473
    %v519 = vmul.f32 %v119, %v475
    %v520 = vmul.f32 %v114, %v477
    %v521 = vmul.f32 %v119, %v479
    %v522 = vmul.f32 %v114, %v481
    %v523 = vmul.f32 %v119, %v483
    %v524 = vmul.f32 %v114, %v485
    %v525 = vmul.f32 %v119, %v487
    %v526 = vmul.f32 %v114, %v489
    %v527 = vmul.f32 %v119, %v491
    %v528 = vmul.f32 %v114, %v493
    %v529 = vmul.f32 %v119, %v495
    %v530 = vmul.f32 %v114, %v497
    %v531 = vmul.f32 %v119, %v499
    %548 = vrot.lane.b32.xlu0 %v516, 64
    %v549 = vpop.permute.xlu0 %548
    %550 = vrot.lane.b32.xlu0 %v517, 64
    %v551 = vpop.permute.xlu0 %550
    %552 = vrot.lane.b32.xlu0 %v518, 64
    %v553 = vpop.permute.xlu0 %552
    %554 = vrot.lane.b32.xlu0 %v519, 64
    %v555 = vpop.permute.xlu0 %554
    %556 = vrot.lane.b32.xlu0 %v520, 64
    %v557 = vpop.permute.xlu0 %556
    %558 = vrot.lane.b32.xlu0 %v521, 64
    %v559 = vpop.permute.xlu0 %558
    %560 = vrot.lane.b32.xlu0 %v522, 64
    %v561 = vpop.permute.xlu0 %560
    %562 = vrot.lane.b32.xlu0 %v523, 64
    %v563 = vpop.permute.xlu0 %562
    %564 = vrot.lane.b32.xlu0 %v524, 64
    %v565 = vpop.permute.xlu0 %564
    %566 = vrot.lane.b32.xlu0 %v525, 64
    %v567 = vpop.permute.xlu0 %566
    %568 = vrot.lane.b32.xlu0 %v526, 64
    %v569 = vpop.permute.xlu0 %568
    %570 = vrot.lane.b32.xlu0 %v527, 64
    %v571 = vpop.permute.xlu0 %570
    %572 = vrot.lane.b32.xlu0 %v528, 64
    %v573 = vpop.permute.xlu0 %572
    %574 = vrot.lane.b32.xlu0 %v529, 64
    %v575 = vpop.permute.xlu0 %574
    %576 = vrot.lane.b32.xlu0 %v530, 64
    %v577 = vpop.permute.xlu0 %576
    %578 = vrot.lane.b32.xlu0 %v531, 64
    %v579 = vpop.permute.xlu0 %578
    %596 = vmatprep.subr.mxu0 0.0
    %597 = vmatpush1.msra.mxu0 %v549
    %598 = vmatprep.subr.mxu0 0.0
    %599 = vmatpush1.msra.mxu0 %v551
    %600 = vmatprep.subr.mxu0 0.0
    %601 = vmatpush1.msra.mxu0 %v553
    %602 = vmatprep.subr.mxu0 0.0
    %603 = vmatpush1.msra.mxu0 %v555
    %604 = vmatprep.subr.mxu0 0.0
    %605 = vmatpush1.msra.mxu0 %v557
    %606 = vmatprep.subr.mxu0 0.0
    %607 = vmatpush1.msra.mxu0 %v559
    %608 = vmatprep.subr.mxu0 0.0
    %609 = vmatpush1.msra.mxu0 %v561
    %610 = vmatprep.subr.mxu0 0.0
    %611 = vmatpush1.msra.mxu0 %v563
    %612 = vmatprep.subr.mxu0 0.0
    %613 = vmatpush1.msra.mxu0 %v565
    %614 = vmatprep.subr.mxu0 0.0
    %615 = vmatpush1.msra.mxu0 %v567
    %616 = vmatprep.subr.mxu0 0.0
    %617 = vmatpush1.msra.mxu0 %v569
    %618 = vmatprep.subr.mxu0 0.0
    %619 = vmatpush1.msra.mxu0 %v571
    %620 = vmatprep.subr.mxu0 0.0
    %621 = vmatpush1.msra.mxu0 %v573
    %622 = vmatprep.subr.mxu0 0.0
    %623 = vmatpush1.msra.mxu0 %v575
    %624 = vmatprep.subr.mxu0 0.0
    %625 = vmatpush1.msra.mxu0 %v577
    %626 = vmatprep.subr.mxu0 0.0
    %627 = vmatpush1.msra.mxu0 %v579
    %628 = vmatprep.subr.mxu0 0.0
    %629 = vmatpush1.msra.mxu0 0.0
    %630 = vmatprep.subr.mxu0 0.0
    %631 = vmatpush1.msra.mxu0 0.0
    %632 = vmatprep.subr.mxu0 0.0
    %633 = vmatpush1.msra.mxu0 0.0
    %634 = vmatprep.subr.mxu0 0.0
    %635 = vmatpush1.msra.mxu0 0.0
    %636 = vmatprep.subr.mxu0 0.0
    %637 = vmatpush1.msra.mxu0 0.0
    %638 = vmatprep.subr.mxu0 0.0
    %639 = vmatpush1.msra.mxu0 0.0
    %640 = vmatprep.subr.mxu0 0.0
    %641 = vmatpush1.msra.mxu0 0.0
    %642 = vmatprep.subr.mxu0 0.0
    %643 = vmatpush1.msra.mxu0 0.0
    %644 = vmatprep.subr.mxu0 0.0
    %645 = vmatpush1.msra.mxu0 0.0
    %646 = vmatprep.subr.mxu0 0.0
    %647 = vmatpush1.msra.mxu0 0.0
    %648 = vmatprep.subr.mxu0 0.0
    %649 = vmatpush1.msra.mxu0 0.0
    %650 = vmatprep.subr.mxu0 0.0
    %651 = vmatpush1.msra.mxu0 0.0
    %652 = vmatprep.subr.mxu0 0.0
    %653 = vmatpush1.msra.mxu0 0.0
    %654 = vmatprep.subr.mxu0 0.0
    %655 = vmatpush1.msra.mxu0 0.0
    %656 = vmatprep.subr.mxu0 0.0
    %657 = vmatpush1.msra.mxu0 0.0
    %658 = vmatprep.subr.mxu0 0.0
    %659 = vmatpush1.msra.mxu0 0.0
    %660 = vmatprep.mubr.f32.mxu0 0.0
    %661 = vmatmul.mubr.f32.gmra.mrb[0].mxu0 %v390
    %v662 = vpop.f32.mrb[0].mxu0
    %v663 = vadd.f32 0.0, %v662
    %v664 = vpop.f32.mrb[0].mxu0
    %665 = vmatprep.mubr.f32.mxu0 0.0
    %666 = vmatmul.mubr.f32.gmra.mrb[0].mxu0 %v392
    %v667 = vpop.f32.mrb[0].mxu0
    %v668 = vadd.f32 0.0, %v667
    %v669 = vpop.f32.mrb[0].mxu0
    %670 = vdwg.mxu0
    %v671 = vrcp.pop %v460
    %v672 = vmul.f32 %v663, %v671
    %v673 = vrcp.pop %v465
    %v674 = vmul.f32 %v668, %v673
    %v675 = vld [vmem:[%s3] sm:$0xff]
    %v676 = vld [vmem:[%s3 + $0x8] sm:$0xff]
    %v677 = vld [vmem:[%s3 + $0x10] sm:$0xff]
    %v678 = vld [vmem:[%s3 + $0x18] sm:$0xff]
    %v679 = vld [vmem:[%s4] sm:$0x1]
    %v681 = vlaneseq
    %v682 = vshrl.u32 %v681, 7
    %v683 = vsub.s32 0, %v682
    %v684 = vrot.slane %v679, %v683
    %v687 = vsel %vm40, %v672, 0
    %v690 = vsel %vm40, %v674, 0
    %692 = vmatprep.subr.mxu0 0.0
    %693 = vmatpush1.msra.mxu0 %v675
    %694 = vmatprep.subr.mxu0 0.0
    %695 = vmatpush1.msra.mxu0 %v676
    %696 = vmatprep.subr.mxu0 0.0
    %697 = vmatpush1.msra.mxu0 %v677
    %698 = vmatprep.subr.mxu0 0.0
    %699 = vmatpush1.msra.mxu0 %v678
    %700 = vmatprep.subr.mxu0 0.0
    %701 = vmatpush1.msra.mxu0 0.0
    %702 = vmatprep.subr.mxu0 0.0
    %703 = vmatpush1.msra.mxu0 0.0
    %704 = vmatprep.subr.mxu0 0.0
    %705 = vmatpush1.msra.mxu0 0.0
    %706 = vmatprep.subr.mxu0 0.0
    %707 = vmatpush1.msra.mxu0 0.0
    %708 = vmatprep.subr.mxu0 0.0
    %709 = vmatpush1.msra.mxu0 0.0
    %710 = vmatprep.subr.mxu0 0.0
    %711 = vmatpush1.msra.mxu0 0.0
    %712 = vmatprep.subr.mxu0 0.0
    %713 = vmatpush1.msra.mxu0 0.0
    %714 = vmatprep.subr.mxu0 0.0
    %715 = vmatpush1.msra.mxu0 0.0
    %716 = vmatprep.subr.mxu0 0.0
    %717 = vmatpush1.msra.mxu0 0.0
    %718 = vmatprep.subr.mxu0 0.0
    %719 = vmatpush1.msra.mxu0 0.0
    %720 = vmatprep.subr.mxu0 0.0
    %721 = vmatpush1.msra.mxu0 0.0
    %722 = vmatprep.subr.mxu0 0.0
    %723 = vmatpush1.msra.mxu0 0.0
    %724 = vmatprep.subr.mxu0 0.0
    %725 = vmatpush1.msra.mxu0 0.0
    %726 = vmatprep.subr.mxu0 0.0
    %727 = vmatpush1.msra.mxu0 0.0
    %728 = vmatprep.subr.mxu0 0.0
    %729 = vmatpush1.msra.mxu0 0.0
    %730 = vmatprep.subr.mxu0 0.0
    %731 = vmatpush1.msra.mxu0 0.0
    %732 = vmatprep.subr.mxu0 0.0
    %733 = vmatpush1.msra.mxu0 0.0
    %734 = vmatprep.subr.mxu0 0.0
    %735 = vmatpush1.msra.mxu0 0.0
    %736 = vmatprep.subr.mxu0 0.0
    %737 = vmatpush1.msra.mxu0 0.0
    %738 = vmatprep.subr.mxu0 0.0
    %739 = vmatpush1.msra.mxu0 0.0
    %740 = vmatprep.subr.mxu0 0.0
    %741 = vmatpush1.msra.mxu0 0.0
    %742 = vmatprep.subr.mxu0 0.0
    %743 = vmatpush1.msra.mxu0 0.0
    %744 = vmatprep.subr.mxu0 0.0
    %745 = vmatpush1.msra.mxu0 0.0
    %746 = vmatprep.subr.mxu0 0.0
    %747 = vmatpush1.msra.mxu0 0.0
    %748 = vmatprep.subr.mxu0 0.0
    %749 = vmatpush1.msra.mxu0 0.0
    %750 = vmatprep.subr.mxu0 0.0
    %751 = vmatpush1.msra.mxu0 0.0
    %752 = vmatprep.subr.mxu0 0.0
    %753 = vmatpush1.msra.mxu0 0.0
    %754 = vmatprep.subr.mxu0 0.0
    %755 = vmatpush1.msra.mxu0 0.0
    %756 = vmatprep.mubr.f32.mxu0 0.0
    %757 = vmatmul.mubr.f32.gmra.mrb[0].mxu0 %v687
    %v758 = vpop.f32.mrb[0].mxu0
    %v759 = vadd.f32 %v684, %v758
    %v760 = vpop.f32.mrb[0].mxu0
    %761 = vmatprep.mubr.f32.mxu0 0.0
    %762 = vmatmul.mubr.f32.gmra.mrb[0].mxu0 %v690
    %v763 = vpop.f32.mrb[0].mxu0
    %v764 = vadd.f32 %v684, %v763
    %v765 = vpop.f32.mrb[0].mxu0
    %766 = vdwg.mxu0
    %767 = vst.msk [vmem:[#allocation2] sm:$0xff] %vm40, %v759
    %768 = vst.msk [vmem:[#allocation2 + $0x8] sm:$0xff] %vm40, %v764
    // Predicated region
    $region30: #{tpu_custom_call.1} parent=1 // pred_check
      _
    $region31: #{tpu_custom_call.1} parent=1 // pred_check_branch
      %770 = sbr.rel (0) target = $region33
    $region32: #{tpu_custom_call.1} parent=1 // pred_region
      %s772 = ssub.s32 256, 256
      %773 = vsyncadd [#allocation3], %s772
      %s774 = sshll.u32 [#allocation2], 4
      %s775 = int_to_ptr.vmem [resolvable:$true] %s774
      %780 = dma.vmem_to_hbm [thread:$0]  %s775, 256, %s7, [#allocation3], 128, 128, 8
    $region33: #{tpu_custom_call.1} parent=1 // pred_fallthru
      _
    // Predicated region
    $region34: #{tpu_custom_call.1} parent=1 // pred_check
      _
    $region35: #{tpu_custom_call.1} parent=1 // pred_check_branch
      %782 = sbr.rel (0) target = $region37
    $region36: #{tpu_custom_call.1} parent=1 // pred_region
      %783 = dma.done [#allocation3], 256
    $region37: #{tpu_custom_call.1} parent=1 // pred_fallthru
      _
    %784 = vsyncpa [#allocation3], 1

</llo_original>
